<compile_context>
chip_gen: v5e
topology: v5e:2x2
jax: 0.10.0
libtpu: 0.0.40
codegen_flags: <defaults>
</compile_context>

<pallas_src>
import numpy as np
import jax
import jax.numpy as jnp
from jax.experimental import pallas as pl
from jax.experimental.pallas import tpu as pltpu


def _hbm_to_hbm_copy_kernel(x_ref, o_ref, sem):
    # Fresh-buffer "clone": a single direct HBM->HBM DMA over the whole array.
    cp = pltpu.make_async_copy(x_ref, o_ref, sem)
    cp.start()
    cp.wait()


def bottleneck_forward(hooked_output: jax.Array, *,
                       force_fresh_buffer: bool = False) -> jax.Array:
    """JAX/Pallas equivalent of Bottleneck.forward()'s flatten + Identity.

    Default: metadata-only reshape (no copy, no kernel).  With
    force_fresh_buffer=True the result is materialized in a brand-new HBM
    buffer via a direct HBM->HBM DMA Pallas kernel.
    """
    x = hooked_output
    if x.ndim > 2:
        n = int(x.shape[0])
        flat = int(np.prod(x.shape[1:]))
        out_shape = (n, flat)
    else:
        out_shape = tuple(int(d) for d in x.shape)

    # Same contiguous element order as torch's .view(-1, prod(rest)).
    x2 = jnp.reshape(x, out_shape)

    if not force_fresh_buffer:
        # clone() is a no-op on immutable JAX arrays: skip the redundant
        # 2x-bytes HBM round trip and the pallas_call launch overhead.
        return x2

    nbytes = int(np.prod(out_shape)) * jnp.dtype(x.dtype).itemsize
    return pl.pallas_call(
        _hbm_to_hbm_copy_kernel,
        out_shape=jax.ShapeDtypeStruct(out_shape, x.dtype),
        in_specs=[pl.BlockSpec(memory_space=pl.ANY)],   # stay in HBM
        out_specs=pl.BlockSpec(memory_space=pl.ANY),    # stay in HBM
        scratch_shapes=[pltpu.SemaphoreType.DMA(())],
        cost_estimate=pl.CostEstimate(
            flops=0, transcendentals=0, bytes_accessed=2 * nbytes),
    )(x2)


class Bottleneck:
    """Mirror of the PyTorch module: holds the activation captured by the
    forward Hook and applies an identity classifier.  No learnable params."""

    # TODO(synk): torch's forward-hook registration has no JAX equivalent;
    # the captured activation is passed in explicitly instead.

    def __init__(self, hooked_output: jax.Array):
        self._hooked_output = hooked_output  # stands in for Hook(...).output

    def forward(self, *, force_fresh_buffer: bool = False) -> jax.Array:
        # clone().detach() -> stop_gradient (+ optional fresh HBM buffer).
        x = jax.lax.stop_gradient(self._hooked_output)
        return bottleneck_forward(x, force_fresh_buffer=force_fresh_buffer)

    def forward_attached(self) -> jax.Array:
        return bottleneck_forward(self._hooked_output)


if __name__ == "__main__":
    key = jax.random.PRNGKey(0)

    # Synthetic bottleneck activation, NCHW: batch=2, channels=4, 16x16.
    x = jax.random.normal(key, (2, 4, 16, 16), dtype=jnp.float32)
    model = Bottleneck(hooked_output=x)

    # Default (common) path: metadata-only flatten, no HBM traffic.
    out = jax.block_until_ready(model.forward())
    assert out.shape == (2, 4 * 16 * 16), out.shape
    np.testing.assert_array_equal(np.asarray(out), np.asarray(x).reshape(2, -1))

    # Explicit fresh-buffer path: exercises the Pallas HBM->HBM DMA kernel.
    out_copy = jax.block_until_ready(model.forward(force_fresh_buffer=True))
    np.testing.assert_array_equal(np.asarray(out_copy),
                                  np.asarray(x).reshape(2, -1))

    # ndim <= 2 path: identity, shape unchanged (also through the DMA kernel).
    z = jax.random.normal(jax.random.PRNGKey(2), (8, 32), dtype=jnp.float32)
    out_z = jax.block_until_ready(bottleneck_forward(z, force_fresh_buffer=True))
    assert out_z.shape == z.shape
    np.testing.assert_array_equal(np.asarray(out_z), np.asarray(z))

    # Non-f32 dtype: pure-DMA path has no sublane-packing / lane-alignment
    # concerns, so bf16 works without any special tiling.
    y = jax.random.normal(jax.random.PRNGKey(1), (2, 8, 16, 16),
                          dtype=jnp.bfloat16)
    out_y = jax.block_until_ready(bottleneck_forward(y, force_fresh_buffer=True))
    np.testing.assert_array_equal(np.asarray(out_y),
                                  np.asarray(y).reshape(2, -1))

    print("KERNEL_OK")
</pallas_src>

<mosaic_0001>
module attributes {stable_mosaic.version = 11 : i64} {
  func.func @_hbm_to_hbm_copy_kernel(%arg0: memref<2x1024xf32, #tpu.memory_space<any>>, %arg1: memref<2x1024xf32, #tpu.memory_space<any>>, %arg2: memref<!tpu.dma_semaphore, #tpu.memory_space<semaphore_mem>>) attributes {dimension_semantics = [], scalar_prefetch = 0 : i64, scratch_operands = 1 : i64, tpu.core_type = #tpu.core_type<tc>} {
    tpu.enqueue_dma source(%arg0 : memref<2x1024xf32, #tpu.memory_space<any>>) target(%arg1 : memref<2x1024xf32, #tpu.memory_space<any>>) target_semaphore(%arg2 : memref<!tpu.dma_semaphore, #tpu.memory_space<semaphore_mem>>)
    tpu.wait_dma2 semaphore(%arg2 : memref<!tpu.dma_semaphore, #tpu.memory_space<semaphore_mem>>) src(%arg0 : memref<2x1024xf32, #tpu.memory_space<any>>) dst(%arg1 : memref<2x1024xf32, #tpu.memory_space<any>>)
    return
  }
}

</mosaic_0001>

<llo_original>
// kernel: tpu_custom_call.1
$region0: #{tpu_custom_call.1}
  #allocation0 [shape = 'u32[]', space=smem, size = 0x4, offset = 0x4, fixed_abs, tag = 'smem constant byte address 0x4 - core index']
  #allocation1 [shape = 'u32[72,128]{1,0:T(1,128)}', space=vmem, size = 0x9000, scoped, tag = 'internal scratch']
  #allocation2 [shape = 's32[1]{0}', space=sflag, size = 0x4, scoped, tag = 'scratch operand']
  #allocation3 [shape = 's32[]', space=sflag, size = 0x4, offset = 0, fixed_abs, tag = 'sflag constant byte address 0x0 - dummy sync flag']
  #allocation4 [shape = 'u32[0]{0}', space=smem, size = 0, offset = 0, fixed_abs, tag = 'smem constant byte address 0x0 - null']
  %s0 = inlined_call_operand.hbm [shape: f32[2,1024], index: 0, kind: input, shape index: {}]
  %s1 = inlined_call_operand.hbm [shape: f32[2,1024], index: 1, kind: output, shape index: {}]
  %s2 = sld [smem:[#allocation0]]
  $region2: #{tpu_custom_call.1} parent=0
    _
  %s4 = ssub.s32 1, %s2
  %s5 = scalar_select 0, %s4, %s2
  %s7 = sshll.u32 1, 14
  %s8 = sxor.u32 4294967295, %s7
  %s10 = sshll.u32 %s0, 4
  %s11 = int_to_ptr.hbm [resolvable:$true] %s10
  %s12 = sshll.u32 %s1, 4
  %s13 = int_to_ptr.hbm [resolvable:$true] %s12
  %16 = dma.general %s11, 256, %s13, [#allocation2], [#allocation3], [#allocation4], 0, 0
  %s17 = smul.u32 2, 1
  %s18 = smul.u32 %s17, 8
  %s19 = sshll.u32 %s18, 4
  %20 = dma.done [#allocation2], %s19
  %21 = vsyncmov [#allocation2]
  %s22 = vpop.sfrf %21
  %p23 = scmp.eq.s32.totalorder %s22, 0
  %p24 = pneg %p23
  %26 = shalt.err (%p24)

</llo_original>
